<compile_context>
chip_gen: v7x
topology: tpu7x:2x2x1
jax: 0.10.0
libtpu: 0.0.40
codegen_flags: <defaults>
</compile_context>

<pallas_src>
import jax
import jax.numpy as jnp
from jax import lax
from jax.experimental import pallas as pl
from jax.experimental.pallas import tpu as pltpu

EPS = 1e-07
_LANES = 128
_MAX_BLOCK_ROWS = 8192


def _vmem_capacity_bytes():
    try:
        return int(pltpu.get_tpu_info().vmem_capacity_bytes)
    except Exception:
        return 64 * 1024 * 1024  # most conservative physical VMEM (v7x per-TC)


def _sublane(itemsize):
    return max(8, 32 // max(itemsize, 1))  # 8 rows f32, 16 bf16, 32 int8


def _round_up(x, m):
    return ((x + m - 1) // m) * m


def _make_adain_kernel(g, f, eps):
    """Kernel closure: g logical rows folded per VMEM row, f features each."""
    inv_f = 1.0 / f
    inv_fm1 = 1.0 / (f - 1)          # ddof=1 (PyTorch .std default)

    def kernel(noise_ref, base_ref, out_ref):
        noise = noise_ref[...].astype(jnp.float32)   # (tb, L) with L = g*f
        base = base_ref[...].astype(jnp.float32)

        if g == 1:
            # Features already span the lane axis: plain lane reductions.
            def row_sum(x):                 # (tb, L) -> (tb, 1)
                return jnp.sum(x, axis=-1, keepdims=True)

            def bcast(v):                   # (tb, 1) broadcasts naturally
                return v
        else:
            # g logical rows share one 128-lane row; per-group sums / broadcasts
            # go through tiny block-diagonal 0/1 matmuls on the idle MXU.
            L = g * f
            lane = lax.broadcasted_iota(jnp.int32, (L, g), 0)
            grp = lax.broadcasted_iota(jnp.int32, (L, g), 1)
            fwd = (lane // f == grp).astype(jnp.float32)       # (L, g)
            grp2 = lax.broadcasted_iota(jnp.int32, (g, L), 0)
            lane2 = lax.broadcasted_iota(jnp.int32, (g, L), 1)
            bwd = (lane2 // f == grp2).astype(jnp.float32)     # (g, L)

            def row_sum(x):                 # (tb, L) -> (tb, g)
                return jnp.dot(x, fwd, precision=lax.Precision.HIGHEST,
                               preferred_element_type=jnp.float32)

            def bcast(v):                   # (tb, g) -> (tb, L)
                return jnp.dot(v, bwd, precision=lax.Precision.HIGHEST,
                               preferred_element_type=jnp.float32)

        # Two-pass statistics (mean, then centered sum of squares): matches the
        # PyTorch mean/std numerics and avoids catastrophic cancellation of a
        # one-pass sum / sum-of-squares when |mean| >> std.
        n_mean = row_sum(noise) * inv_f
        b_mean = row_sum(base) * inv_f
        b_mean_full = bcast(b_mean)
        nc = noise - bcast(n_mean)
        bc = base - b_mean_full
        n_var = jnp.maximum(row_sum(nc * nc), 0.0) * inv_fm1
        b_var = jnp.maximum(row_sum(bc * bc), 0.0) * inv_fm1
        n_std = jnp.sqrt(n_var)
        b_std = jnp.sqrt(b_var)

        # scale = b_std / (n_std + eps): EUP reciprocal seed + 2 Newton steps,
        # all on per-row vectors, essentially free.
        denom = n_std + eps
        inv = pl.reciprocal(denom, approx=True)
        inv = inv * (2.0 - denom * inv)
        inv = inv * (2.0 - denom * inv)
        scale_full = bcast(b_std * inv)

        # Fused epilogue: only 2 full-block VALU passes (mul + add).
        # Padded tail-block rows may compute garbage; their writes are discarded.
        out_ref[...] = (nc * scale_full + b_mean_full).astype(out_ref.dtype)

    return kernel


def _pick_block_b(B, L, itemsize, budget_bytes):
    """Batch-tile size.

    Live VMEM per block row ~= 3 arrays x 2 pipeline buffers at input dtype
    plus ~6 full-block f32 temporaries inside the kernel body (upcasts,
    centered copies, products).  Targets ~4 MiB per input block (well past the
    measured HBM-roofline knee), cap 8192 rows, rounded to sublane granularity.
    """
    sub = _sublane(itemsize)
    bytes_per_row = L * itemsize
    live_per_row = 6 * bytes_per_row + 6 * L * 4
    vmem_cap = max(sub, budget_bytes // live_per_row)
    target = max(sub, (4 * 1024 * 1024) // bytes_per_row)
    blk = max(sub, (min(vmem_cap, target, _MAX_BLOCK_ROWS) // sub) * sub)
    # Guarantee >= 2 grid steps whenever the batch is big enough so both v7x
    # TensorCores (dimension_semantics="parallel") drive HBM; no-op on 1-TC chips.
    if B > sub:
        half = _round_up(pl.cdiv(B, 2), sub)
        blk = min(blk, half)
    if B <= blk:
        return B      # single block covering the whole (small) batch
    return blk


def adain(noise, base_img, *, eps=EPS, block_b=None):
    """AdaIN forward.  noise, base_img: (B, num_features) -> (B, num_features)."""
    assert noise.shape == base_img.shape and noise.ndim == 2
    B, F = noise.shape
    assert F >= 2, "AdaIN with unbiased std (ddof=1) requires num_features >= 2"
    itemsize = jnp.dtype(noise.dtype).itemsize

    # Lane-density folding for sub-128 feature dims (free row-major reshape).
    g = 1
    if F < _LANES and _LANES % F == 0:
        cand = _LANES // F
        if B % cand == 0:
            g = cand
    # TODO(synk): F > 128 with F % 128 != 0 could also be folded (g*F % 128 == 0);
    # left unfolded here — it only costs lane padding, never correctness.
    L = g * F
    Bv = B // g
    noise_v = noise.reshape(Bv, L)
    base_v = base_img.reshape(Bv, L)

    capacity = _vmem_capacity_bytes()
    # Generation-aware budget: <= ~3/4 of physical VMEM, capped at 48 MiB so a
    # block sized on 128-MiB chips (v5e/v6e) never overflows v7x's 64 MiB.
    budget = min((capacity * 3) // 4, 48 * 1024 * 1024)
    if block_b is None:
        block_b = _pick_block_b(Bv, L, itemsize, budget)

    live_bytes = block_b * L * (6 * itemsize + 6 * 4)
    vmem_limit = int(min(capacity,
                         max(32 * 1024 * 1024, live_bytes + 8 * 1024 * 1024)))

    grid = (pl.cdiv(Bv, block_b),)
    spec = pl.BlockSpec((block_b, L), lambda i: (i, 0))
    out_v = pl.pallas_call(
        _make_adain_kernel(g, F, eps),
        out_shape=jax.ShapeDtypeStruct((Bv, L), noise.dtype),
        grid_spec=pltpu.PrefetchScalarGridSpec(
            num_scalar_prefetch=0,
            grid=grid,
            in_specs=[spec, spec],
            out_specs=spec,
        ),
        compiler_params=pltpu.CompilerParams(
            dimension_semantics=("parallel",),
            vmem_limit_bytes=vmem_limit,
        ),
    )(noise_v, base_v)
    return out_v.reshape(B, F)


def _adain_ref(noise, base_img, eps=EPS):
    # Pure-JAX reference mirroring the PyTorch semantics (unbiased std, two-pass).
    def mstd(x):
        m = jnp.mean(x, axis=1, keepdims=True)
        s = jnp.sqrt(jnp.sum((x - m) ** 2, axis=1, keepdims=True) / (x.shape[1] - 1))
        return m, s
    n_m, n_s = mstd(noise)
    b_m, b_s = mstd(base_img)
    return b_s * (noise - n_m) / (n_s + eps) + b_m


if __name__ == "__main__":
    key = jax.random.PRNGKey(0)
    k1, k2, k3, k4, k5, k6 = jax.random.split(key, 6)

    # 1) Small shape matching the module's intended use: (B, num_features).
    #    B % (128 // F) != 0 here, so this exercises the unfolded fallback path.
    B, F = 2, 32
    noise = jax.random.normal(k1, (B, F), dtype=jnp.float32)
    base = jax.random.normal(k2, (B, F), dtype=jnp.float32)
    out = jax.block_until_ready(adain(noise, base))
    ref = _adain_ref(noise, base)
    assert out.shape == (B, F)
    assert jnp.allclose(out, ref, atol=1e-5, rtol=1e-4), "mismatch (small / unfolded)"

    # 2) Sub-128 feature dim with B % (128 // F) == 0: exercises the lane-dense
    #    folded path (g = 4) with in-kernel group reductions; inputs get a DC
    #    offset to exercise the two-pass variance accuracy.
    B2, F2 = 256, 32
    noise2 = jax.random.normal(k3, (B2, F2), dtype=jnp.float32) * 2.0 + 3.0
    base2 = jax.random.normal(k4, (B2, F2), dtype=jnp.float32) - 1.0
    out2 = jax.block_until_ready(adain(noise2, base2))
    ref2 = _adain_ref(noise2, base2)
    assert jnp.allclose(out2, ref2, atol=1e-4, rtol=1e-4), "mismatch (folded)"

    # 3) Larger batch, already lane-dense F: multi-step pipeline with >= 2 grid
    #    steps and a ragged tail block (padded rows computed but discarded).
    B3, F3 = 1000, 512
    noise3 = jax.random.normal(k5, (B3, F3), dtype=jnp.float32)
    base3 = jax.random.normal(k6, (B3, F3), dtype=jnp.float32)
    out3 = jax.block_until_ready(adain(noise3, base3))
    ref3 = _adain_ref(noise3, base3)
    assert jnp.allclose(out3, ref3, atol=1e-5, rtol=1e-4), "mismatch (tiled)"

    print("KERNEL_OK")
</pallas_src>

<mosaic_0001>
module attributes {stable_mosaic.version = 11 : i64} {
  func.func @kernel(%arg0: i32, %arg1: memref<2x32xf32, #tpu.memory_space<vmem>>, %arg2: memref<2x32xf32, #tpu.memory_space<vmem>>, %arg3: memref<2x32xf32, #tpu.memory_space<vmem>>) attributes {dimension_semantics = [#tpu.dimension_semantics<parallel>], iteration_bounds = array<i64: 1>, scalar_prefetch = 0 : i64, scratch_operands = 0 : i64, tpu.core_type = #tpu.core_type<tc>, window_params = [{transform_indices = @transform_0, window_bounds = array<i64: 2, 32>}, {transform_indices = @transform_1, window_bounds = array<i64: 2, 32>}, {transform_indices = @transform_2, window_bounds = array<i64: 2, 32>}]} {
    %c0 = arith.constant 0 : index
    %c0_0 = arith.constant 0 : index
    %0 = vector.load %arg1[%c0, %c0_0] : memref<2x32xf32, #tpu.memory_space<vmem>>, vector<2x32xf32>
    %c0_1 = arith.constant 0 : index
    %c0_2 = arith.constant 0 : index
    %1 = vector.load %arg2[%c0_1, %c0_2] : memref<2x32xf32, #tpu.memory_space<vmem>>, vector<2x32xf32>
    %cst = arith.constant dense<0.000000e+00> : vector<2xf32>
    %2 = vector.multi_reduction <add>, %0, %cst [1] : vector<2x32xf32> to vector<2xf32>
    %3 = vector.shape_cast %2 : vector<2xf32> to vector<2x1xf32>
    %cst_3 = arith.constant 3.125000e-02 : f32
    %4 = vector.broadcast %cst_3 : f32 to vector<2x1xf32>
    %5 = arith.mulf %3, %4 : vector<2x1xf32>
    %cst_4 = arith.constant dense<0.000000e+00> : vector<2xf32>
    %6 = vector.multi_reduction <add>, %1, %cst_4 [1] : vector<2x32xf32> to vector<2xf32>
    %7 = vector.shape_cast %6 : vector<2xf32> to vector<2x1xf32>
    %cst_5 = arith.constant 3.125000e-02 : f32
    %8 = vector.broadcast %cst_5 : f32 to vector<2x1xf32>
    %9 = arith.mulf %7, %8 : vector<2x1xf32>
    %10 = vector.broadcast %5 : vector<2x1xf32> to vector<2x32xf32>
    %11 = arith.subf %0, %10 : vector<2x32xf32>
    %12 = vector.broadcast %9 : vector<2x1xf32> to vector<2x32xf32>
    %13 = arith.subf %1, %12 : vector<2x32xf32>
    %14 = arith.mulf %11, %11 : vector<2x32xf32>
    %cst_6 = arith.constant dense<0.000000e+00> : vector<2xf32>
    %15 = vector.multi_reduction <add>, %14, %cst_6 [1] : vector<2x32xf32> to vector<2xf32>
    %16 = vector.shape_cast %15 : vector<2xf32> to vector<2x1xf32>
    %cst_7 = arith.constant 0.000000e+00 : f32
    %17 = vector.broadcast %cst_7 : f32 to vector<2x1xf32>
    %18 = arith.maximumf %16, %17 : vector<2x1xf32>
    %cst_8 = arith.constant 0.0322580636 : f32
    %19 = vector.broadcast %cst_8 : f32 to vector<2x1xf32>
    %20 = arith.mulf %18, %19 : vector<2x1xf32>
    %21 = arith.mulf %13, %13 : vector<2x32xf32>
    %cst_9 = arith.constant dense<0.000000e+00> : vector<2xf32>
    %22 = vector.multi_reduction <add>, %21, %cst_9 [1] : vector<2x32xf32> to vector<2xf32>
    %23 = vector.shape_cast %22 : vector<2xf32> to vector<2x1xf32>
    %cst_10 = arith.constant 0.000000e+00 : f32
    %24 = vector.broadcast %cst_10 : f32 to vector<2x1xf32>
    %25 = arith.maximumf %23, %24 : vector<2x1xf32>
    %cst_11 = arith.constant 0.0322580636 : f32
    %26 = vector.broadcast %cst_11 : f32 to vector<2x1xf32>
    %27 = arith.mulf %25, %26 : vector<2x1xf32>
    %28 = math.sqrt %20 : vector<2x1xf32>
    %29 = math.sqrt %27 : vector<2x1xf32>
    %cst_12 = arith.constant 1.000000e-07 : f32
    %30 = vector.broadcast %cst_12 : f32 to vector<2x1xf32>
    %31 = arith.addf %28, %30 : vector<2x1xf32>
    %32 = tpu.reciprocal %31 {approx = true} : vector<2x1xf32> -> vector<2x1xf32>
    %33 = arith.mulf %31, %32 : vector<2x1xf32>
    %cst_13 = arith.constant 2.000000e+00 : f32
    %34 = vector.broadcast %cst_13 : f32 to vector<2x1xf32>
    %35 = arith.subf %34, %33 : vector<2x1xf32>
    %36 = arith.mulf %32, %35 : vector<2x1xf32>
    %37 = arith.mulf %31, %36 : vector<2x1xf32>
    %cst_14 = arith.constant 2.000000e+00 : f32
    %38 = vector.broadcast %cst_14 : f32 to vector<2x1xf32>
    %39 = arith.subf %38, %37 : vector<2x1xf32>
    %40 = arith.mulf %36, %39 : vector<2x1xf32>
    %41 = arith.mulf %29, %40 : vector<2x1xf32>
    %42 = vector.broadcast %41 : vector<2x1xf32> to vector<2x32xf32>
    %43 = arith.mulf %11, %42 : vector<2x32xf32>
    %44 = vector.broadcast %9 : vector<2x1xf32> to vector<2x32xf32>
    %45 = arith.addf %43, %44 : vector<2x32xf32>
    %c0_15 = arith.constant 0 : index
    %c0_16 = arith.constant 0 : index
    %46 = vector.load %arg3[%c0_15, %c0_16] : memref<2x32xf32, #tpu.memory_space<vmem>>, vector<2x32xf32>
    tpu.vector_store %arg3[%c0_15, %c0_16], %45 {strides = array<i32>} : memref<2x32xf32, #tpu.memory_space<vmem>>, vector<2x32xf32>,
    return
  }
  func.func @transform_0(%arg0: i32) -> (i32, i32) {
    %c0_i32 = arith.constant 0 : i32
    %c0_i32_0 = arith.constant 0 : i32
    return %arg0, %c0_i32 : i32, i32
  }
  func.func @transform_1(%arg0: i32) -> (i32, i32) {
    %c0_i32 = arith.constant 0 : i32
    %c0_i32_0 = arith.constant 0 : i32
    return %arg0, %c0_i32 : i32, i32
  }
  func.func @transform_2(%arg0: i32) -> (i32, i32) {
    %c0_i32 = arith.constant 0 : i32
    %c0_i32_0 = arith.constant 0 : i32
    return %arg0, %c0_i32 : i32, i32
  }
}

</mosaic_0001>

<llo_original>
// kernel: tpu_custom_call.1
$region0: #{tpu_custom_call.1}
  #allocation0 [shape = 'u32[]', space=smem, size = 0x4, offset = 0x4, fixed_abs, tag = 'smem constant byte address 0x4 - core index']
  #allocation1 [shape = 'u32[144,128]{1,0:T(1,128)}', space=vmem, size = 0x12000, scoped, tag = 'internal scratch']
  %s0 = inlined_call_operand.hbm [shape: f32[2,32], index: 0, kind: input, shape index: {}]
  %s1 = inlined_call_operand.vmem [shape: f32[2,32], index: 1, kind: input, shape index: {}]
  %s2 = inlined_call_operand.hbm [shape: f32[2,32], index: 2, kind: output, shape index: {}]
  %s3 = sld [smem:[#allocation0]]
  $region22: #{tpu_custom_call.1} parent=0
    _
  %s5 = ssub.s32 1, %s3
  %s6 = scalar_select 0, %s5, %s3
  $region1: #{tpu_custom_call.1} parent=0
    #allocation2 [shape = 'u8[1024]{0}', space=vmem, size = 0x400, scoped, tag = 'input window, operand 0, single buffered']
    #allocation3 [shape = 's32[1]{0}', space=sflag, size = 0x4, scoped, tag = 'scoped memory for tpu_custom_call.1']
    #allocation4 [shape = 's32[1]{0}', space=sflag, size = 0x4, scoped, tag = 'scoped memory for tpu_custom_call.1']
    #allocation5 [shape = 'u8[1024]{0}', space=vmem, size = 0x400, scoped, tag = 'output window, operand 0, single buffered']
    %7 = vsyncpa [#allocation3], 0
    %8 = vsyncpa [#allocation4], 0
    // Predicated region
    $region2: #{tpu_custom_call.1} parent=1 // pred_check
      _
    $region3: #{tpu_custom_call.1} parent=1 // pred_check_branch
      %10 = sbr.rel (0) target = $region5
    $region4: #{tpu_custom_call.1} parent=1 // pred_region
      %s12 = ssub.s32 32, 32
      %13 = vsyncadd [#allocation3], %s12
      %s15 = sshll.u32 [#allocation2], 4
      %s16 = int_to_ptr.vmem [resolvable:$true] %s15
      %18 = dma.hbm_to_vmem [thread:$0]  %s0, 32, %s16, [#allocation3]
    $region5: #{tpu_custom_call.1} parent=1 // pred_fallthru
      _
    // Predicated region
    $region6: #{tpu_custom_call.1} parent=1 // pred_check
      _
    $region7: #{tpu_custom_call.1} parent=1 // pred_check_branch
      %20 = sbr.rel (0) target = $region9
    $region8: #{tpu_custom_call.1} parent=1 // pred_region
      _
    $region9: #{tpu_custom_call.1} parent=1 // pred_fallthru
      _
    // Predicated region
    $region10: #{tpu_custom_call.1} parent=1 // pred_check
      _
    $region11: #{tpu_custom_call.1} parent=1 // pred_check_branch
      %22 = sbr.rel (0) target = $region13
    $region12: #{tpu_custom_call.1} parent=1 // pred_region
      %23 = dma.done [#allocation3], 32
    $region13: #{tpu_custom_call.1} parent=1 // pred_fallthru
      _
    %v24 = vld [vmem:[#allocation2] sm:$0x3]
    %v25 = vld [vmem:[%s1] sm:$0x3]
    %vm26 = vcmask 254976
    %v27 = vsel %vm26, %v24, 0.0
    %28 = vadd.xlane.f32.xlu0 %v27
    %v29 = vpop.xlane.xlu0 %28
    %v30 = vmul.f32 %v29, 0.03125
    %v31 = vsel %vm26, %v25, 0.0
    %32 = vadd.xlane.f32.xlu0 %v31
    %v33 = vpop.xlane.xlu0 %32
    %v34 = vmul.f32 %v33, 0.03125
    %v35 = vsub.f32 %v24, %v30
    %v36 = vsub.f32 %v25, %v34
    %v37 = vmul.f32 %v35, %v35
    %v38 = vsel %vm26, %v37, 0.0
    %39 = vadd.xlane.f32.xlu0 %v38
    %v40 = vpop.xlane.xlu0 %39
    %v41 = vmax.f32 %v40, 0.0
    %v42 = vmul.f32 %v41, 0.032258064
    %v43 = vmul.f32 %v36, %v36
    %v44 = vsel %vm26, %v43, 0.0
    %45 = vadd.xlane.f32.xlu0 %v44
    %v46 = vpop.xlane.xlu0 %45
    %v47 = vmax.f32 %v46, 0.0
    %v48 = vmul.f32 %v47, 0.032258064
    %v49 = vrsqrt.pop %v42
    %v50 = vmul.f32 %v42, %v49
    %vm51 = vcmp.eq.f32.partialorder %v42, inf
    %v52 = vsel %vm51, %v42, %v50
    %vm53 = vcmp.eq.f32.partialorder %v42, 0.0
    %v54 = vand.u32 %v42, 2147483648
    %v55 = vsel %vm53, %v54, %v52
    %v56 = vrsqrt.pop %v48
    %v57 = vmul.f32 %v48, %v56
    %vm58 = vcmp.eq.f32.partialorder %v48, inf
    %v59 = vsel %vm58, %v48, %v57
    %vm60 = vcmp.eq.f32.partialorder %v48, 0.0
    %v61 = vand.u32 %v48, 2147483648
    %v62 = vsel %vm60, %v61, %v59
    %v63 = vadd.f32 %v55, 1e-07
    %v64 = vrcp.pop %v63
    %v65 = vmul.f32 %v63, %v64
    %v66 = vsub.f32 2.0, %v65
    %v67 = vmul.f32 %v64, %v66
    %v68 = vmul.f32 %v63, %v67
    %v69 = vsub.f32 2.0, %v68
    %v70 = vmul.f32 %v67, %v69
    %v71 = vmul.f32 %v62, %v70
    %v72 = vmul.f32 %v35, %v71
    %v73 = vadd.f32 %v72, %v34
    %74 = vst.msk [vmem:[#allocation5] sm:$0x3] %vm26, %v73
    // Predicated region
    $region14: #{tpu_custom_call.1} parent=1 // pred_check
      _
    $region15: #{tpu_custom_call.1} parent=1 // pred_check_branch
      %76 = sbr.rel (0) target = $region17
    $region16: #{tpu_custom_call.1} parent=1 // pred_region
      %s78 = ssub.s32 32, 32
      %79 = vsyncadd [#allocation4], %s78
      %s81 = sshll.u32 [#allocation5], 4
      %s82 = int_to_ptr.vmem [resolvable:$true] %s81
      %84 = dma.vmem_to_hbm [thread:$0]  %s82, 32, %s2, [#allocation4]
    $region17: #{tpu_custom_call.1} parent=1 // pred_fallthru
      _
    // Predicated region
    $region18: #{tpu_custom_call.1} parent=1 // pred_check
      _
    $region19: #{tpu_custom_call.1} parent=1 // pred_check_branch
      %86 = sbr.rel (0) target = $region21
    $region20: #{tpu_custom_call.1} parent=1 // pred_region
      %87 = dma.done [#allocation4], 32
    $region21: #{tpu_custom_call.1} parent=1 // pred_fallthru
      _
    %88 = vsyncpa [#allocation3], 1
    %89 = vsyncpa [#allocation4], 1

</llo_original>
